<compile_context>
chip_gen: v7x
topology: tpu7x:2x2x1
jax: 0.10.0
libtpu: 0.0.40
codegen_flags: <defaults>
</compile_context>

<pallas_src>
import functools

import jax
import jax.numpy as jnp
from jax.experimental import pallas as pl
from jax.experimental.pallas import tpu as pltpu

HIDDEN = 128          # stands in for config['hidden_size'] (=768 in the real model)
N_CLASSES = 2
N_PAD = 128           # lane-dense classifier width; sliced back to N_CLASSES
P_DROP = 0.2
VOCAB = 128
SEQ = 16
BATCH_TILE = 8        # rows per grid step (multiple of 8 sublanes)

_DROP_THRESH = int(round(P_DROP * float(1 << 32)))   # keep iff bits >= thresh
_KEEP_SCALE = 1.0 / (1.0 - P_DROP)


def _net_kernel(ids_ref, pool_ref, emb_ref, wp_ref, bp_ref, wfc_ref, bfc_ref,
                rbits_ref, out_ref, *, training: bool):
    """Stand-in encoder (gather + masked mean + pooler tanh) -> dropout -> fc."""
    ids = ids_ref[...]                                   # [Bt*S, 1] int32
    rows = ids.shape[0]
    vocab = emb_ref.shape[0]

    # Embedding gather as a one-hot MXU matmul (no in-kernel gather needed).
    tok = jax.lax.broadcasted_iota(jnp.int32, (rows, vocab), 1)
    onehot = (tok == ids).astype(jnp.float32)            # [Bt*S, V]
    emb = jnp.dot(onehot, emb_ref[...],
                  preferred_element_type=jnp.float32)    # [Bt*S, H]

    # Mask-weighted mean over the sequence via a block-diagonal pooling matrix.
    feat = jnp.dot(pool_ref[...], emb,
                   preferred_element_type=jnp.float32)   # [Bt, H]

    # BERT-pooler-style dense + tanh (bf16 MXU operands, f32 accumulate/elementwise).
    pooled = jnp.tanh(
        jnp.dot(feat.astype(jnp.bfloat16), wp_ref[...],
                preferred_element_type=jnp.float32)
        + bp_ref[...]
    )                                                     # [Bt, H] f32

    # Dropout(p=0.2): integer threshold + fused select; no-op in eval mode.
    if training:
        keep = rbits_ref[...] >= jnp.uint32(_DROP_THRESH)
        x = jnp.where(keep, pooled * _KEEP_SCALE, 0.0)
    else:
        x = pooled

    # Classifier, zero-padded to lane-dense [H, 128]; real logits live in cols [:2].
    logits = (jnp.dot(x, wfc_ref[...], preferred_element_type=jnp.float32)
              + bfc_ref[...])                             # [Bt, 128]
    out_ref[...] = logits.astype(out_ref.dtype)


@functools.partial(jax.jit, static_argnames=("training",))
def net_forward(sent_id, masks, params, seed, training=True):
    """Forward pass mirroring Net.forward(sent_id, masks)."""
    emb_table, w_pool, b_pool, w_fc, b_fc = params
    batch, seq = sent_id.shape
    hidden = emb_table.shape[1]

    # Layout plumbing only (no heavy compute): flatten ids, build the block-diagonal
    # mask-mean pooling matrix, pad the classifier to a lane-dense width, and draw
    # dropout bits with the portable host-side PRNG.
    ids_flat = sent_id.reshape(batch * seq, 1).astype(jnp.int32)
    m = masks.astype(jnp.float32)
    wgt = m / jnp.maximum(m.sum(axis=1, keepdims=True), 1.0)           # [B, S]
    pool = (wgt[:, None, :] * jnp.eye(batch, dtype=jnp.float32)[:, :, None]
            ).reshape(batch, batch * seq)                              # [B, B*S]

    w_fc_pad = jnp.zeros((hidden, N_PAD), jnp.float32).at[:, :N_CLASSES].set(w_fc)
    b_fc_pad = jnp.zeros((1, N_PAD), jnp.float32).at[:, :N_CLASSES].set(b_fc)
    w_pool_bf16 = w_pool.astype(jnp.bfloat16)

    rbits = jax.random.bits(jax.random.PRNGKey(seed), (batch, hidden),
                            dtype=jnp.uint32)

    bt = min(BATCH_TILE, batch)
    grid = (batch // bt,)

    logits_pad = pl.pallas_call(
        functools.partial(_net_kernel, training=training),
        out_shape=jax.ShapeDtypeStruct((batch, N_PAD), jnp.float32),
        grid=grid,
        in_specs=[
            pl.BlockSpec((bt * seq, 1), lambda i: (i, 0)),       # token ids (flat)
            pl.BlockSpec((bt, bt * seq), lambda i: (i, i)),      # pooling matrix (block-diag)
            pl.BlockSpec(emb_table.shape, lambda i: (0, 0)),     # embedding table (resident)
            pl.BlockSpec(w_pool_bf16.shape, lambda i: (0, 0)),   # pooler weight (bf16)
            pl.BlockSpec(b_pool.shape, lambda i: (0, 0)),        # pooler bias
            pl.BlockSpec(w_fc_pad.shape, lambda i: (0, 0)),      # fc weight (lane-padded)
            pl.BlockSpec(b_fc_pad.shape, lambda i: (0, 0)),      # fc bias (lane-padded)
            pl.BlockSpec((bt, hidden), lambda i: (i, 0)),        # dropout random bits
        ],
        out_specs=pl.BlockSpec((bt, N_PAD), lambda i: (i, 0)),
        compiler_params=pltpu.CompilerParams(
            dimension_semantics=("parallel",)),
    )(ids_flat, pool, emb_table, w_pool_bf16, b_pool, w_fc_pad, b_fc_pad, rbits)

    return logits_pad[:, :N_CLASSES]


def init_params(key):
    k_emb, k_wp, k_bp, k_wfc, k_bfc = jax.random.split(key, 5)
    emb_table = jax.random.normal(k_emb, (VOCAB, HIDDEN), jnp.float32) * 0.02
    w_pool = jax.random.normal(k_wp, (HIDDEN, HIDDEN), jnp.float32) * 0.02
    b_pool = jax.random.normal(k_bp, (1, HIDDEN), jnp.float32) * 0.02
    w_fc = jax.random.normal(k_wfc, (HIDDEN, N_CLASSES), jnp.float32) * 0.02
    b_fc = jax.random.normal(k_bfc, (1, N_CLASSES), jnp.float32) * 0.02
    return (emb_table, w_pool, b_pool, w_fc, b_fc)


if __name__ == "__main__":
    key = jax.random.PRNGKey(0)
    k_params, k_ids, k_len = jax.random.split(key, 3)

    B, S = 16, SEQ
    params = init_params(k_params)

    sent_id = jax.random.randint(k_ids, (B, S), 0, VOCAB, dtype=jnp.int32)
    lens = jax.random.randint(k_len, (B,), 4, S + 1, dtype=jnp.int32)
    masks = (jnp.arange(S)[None, :] < lens[:, None]).astype(jnp.float32)

    out = net_forward(sent_id, masks, params, seed=1234, training=True)
    out = jax.block_until_ready(out)
    assert out.shape == (B, N_CLASSES) and out.dtype == jnp.float32
    assert bool(jnp.all(jnp.isfinite(out)))
    print("KERNEL_OK")
</pallas_src>

<mosaic_0001>
module attributes {stable_mosaic.version = 11 : i64} {
  func.func @_net_kernel(%arg0: i32, %arg1: memref<128x1xi32, #tpu.memory_space<vmem>>, %arg2: memref<8x128xf32, #tpu.memory_space<vmem>>, %arg3: memref<128x128xf32, #tpu.memory_space<vmem>>, %arg4: memref<128x128xbf16, #tpu.memory_space<vmem>>, %arg5: memref<1x128xf32, #tpu.memory_space<vmem>>, %arg6: memref<128x128xf32, #tpu.memory_space<vmem>>, %arg7: memref<1x128xf32, #tpu.memory_space<vmem>>, %arg8: memref<8x128xi32, #tpu.memory_space<vmem>>, %arg9: memref<8x128xf32, #tpu.memory_space<vmem>>) attributes {dimension_semantics = [#tpu.dimension_semantics<parallel>], iteration_bounds = array<i64: 2>, scalar_prefetch = 0 : i64, scratch_operands = 0 : i64, tpu.core_type = #tpu.core_type<tc>, window_params = [{transform_indices = @transform_0, window_bounds = array<i64: 128, 1>}, {transform_indices = @transform_1, window_bounds = array<i64: 8, 128>}, {pipeline_mode = #tpu.pipeline_mode<synchronous>, transform_indices = @transform_2, window_bounds = array<i64: 128, 128>}, {pipeline_mode = #tpu.pipeline_mode<synchronous>, transform_indices = @transform_3, window_bounds = array<i64: 128, 128>}, {pipeline_mode = #tpu.pipeline_mode<synchronous>, transform_indices = @transform_4, window_bounds = array<i64: 1, 128>}, {pipeline_mode = #tpu.pipeline_mode<synchronous>, transform_indices = @transform_5, window_bounds = array<i64: 128, 128>}, {pipeline_mode = #tpu.pipeline_mode<synchronous>, transform_indices = @transform_6, window_bounds = array<i64: 1, 128>}, {transform_indices = @transform_7, window_bounds = array<i64: 8, 128>}, {transform_indices = @transform_8, window_bounds = array<i64: 8, 128>}]} {
    %c0 = arith.constant 0 : index
    %c0_0 = arith.constant 0 : index
    %0 = vector.load %arg1[%c0, %c0_0] : memref<128x1xi32, #tpu.memory_space<vmem>>, vector<128x1xi32>
    %1 = tpu.iota {dimensions = array<i32: 1>} : vector<128x128xi32>
    %2 = vector.broadcast %0 : vector<128x1xi32> to vector<128x128xi32>
    %3 = arith.cmpi eq, %1, %2 : vector<128x128xi32>
    %4 = arith.extui %3 : vector<128x128xi1> to vector<128x128xi32>
    %5 = arith.sitofp %4 : vector<128x128xi32> to vector<128x128xf32>
    %c0_1 = arith.constant 0 : index
    %c0_2 = arith.constant 0 : index
    %6 = vector.load %arg3[%c0_1, %c0_2] : memref<128x128xf32, #tpu.memory_space<vmem>>, vector<128x128xf32>
    %cst = arith.constant dense<0.000000e+00> : vector<128x128xf32>
    %7 = tpu.matmul %5, %6, %cst {dimension_numbers = #tpu.dot_dimension_numbers<[1], [0], [0], [1], [0, 0, 1, 1], [], []>} : vector<128x128xf32>, vector<128x128xf32>, vector<128x128xf32> -> vector<128x128xf32>
    %c0_3 = arith.constant 0 : index
    %c0_4 = arith.constant 0 : index
    %8 = vector.load %arg2[%c0_3, %c0_4] : memref<8x128xf32, #tpu.memory_space<vmem>>, vector<8x128xf32>
    %cst_5 = arith.constant dense<0.000000e+00> : vector<8x128xf32>
    %9 = tpu.matmul %8, %7, %cst_5 {dimension_numbers = #tpu.dot_dimension_numbers<[1], [0], [0], [1], [0, 0, 1, 1], [], []>} : vector<8x128xf32>, vector<128x128xf32>, vector<8x128xf32> -> vector<8x128xf32>
    %10 = arith.truncf %9 : vector<8x128xf32> to vector<8x128xbf16>
    %c0_6 = arith.constant 0 : index
    %c0_7 = arith.constant 0 : index
    %11 = vector.load %arg4[%c0_6, %c0_7] : memref<128x128xbf16, #tpu.memory_space<vmem>>, vector<128x128xbf16>
    %cst_8 = arith.constant dense<0.000000e+00> : vector<8x128xf32>
    %12 = tpu.matmul %10, %11, %cst_8 {dimension_numbers = #tpu.dot_dimension_numbers<[1], [0], [0], [1], [0, 0, 1, 1], [], []>} : vector<8x128xbf16>, vector<128x128xbf16>, vector<8x128xf32> -> vector<8x128xf32>
    %c0_9 = arith.constant 0 : index
    %c0_10 = arith.constant 0 : index
    %13 = vector.load %arg5[%c0_9, %c0_10] : memref<1x128xf32, #tpu.memory_space<vmem>>, vector<1x128xf32>
    %14 = vector.broadcast %13 : vector<1x128xf32> to vector<8x128xf32>
    %15 = arith.addf %12, %14 : vector<8x128xf32>
    %16 = math.tanh %15 : vector<8x128xf32>
    %c0_11 = arith.constant 0 : index
    %c0_12 = arith.constant 0 : index
    %17 = vector.load %arg8[%c0_11, %c0_12] : memref<8x128xi32, #tpu.memory_space<vmem>>, vector<8x128xi32>
    %c858993459_i32 = arith.constant 858993459 : i32
    %18 = vector.broadcast %c858993459_i32 : i32 to vector<8x128xi32>
    %19 = arith.cmpi uge, %17, %18 : vector<8x128xi32>
    %cst_13 = arith.constant 1.250000e+00 : f32
    %20 = vector.broadcast %cst_13 : f32 to vector<8x128xf32>
    %21 = arith.mulf %16, %20 : vector<8x128xf32>
    %cst_14 = arith.constant 0.000000e+00 : f32
    %22 = vector.broadcast %cst_14 : f32 to vector<8x128xf32>
    %23 = arith.select %19, %21, %22 : vector<8x128xi1>, vector<8x128xf32>
    %c0_15 = arith.constant 0 : index
    %c0_16 = arith.constant 0 : index
    %24 = vector.load %arg6[%c0_15, %c0_16] : memref<128x128xf32, #tpu.memory_space<vmem>>, vector<128x128xf32>
    %cst_17 = arith.constant dense<0.000000e+00> : vector<8x128xf32>
    %25 = tpu.matmul %23, %24, %cst_17 {dimension_numbers = #tpu.dot_dimension_numbers<[1], [0], [0], [1], [0, 0, 1, 1], [], []>} : vector<8x128xf32>, vector<128x128xf32>, vector<8x128xf32> -> vector<8x128xf32>
    %c0_18 = arith.constant 0 : index
    %c0_19 = arith.constant 0 : index
    %26 = vector.load %arg7[%c0_18, %c0_19] : memref<1x128xf32, #tpu.memory_space<vmem>>, vector<1x128xf32>
    %27 = vector.broadcast %26 : vector<1x128xf32> to vector<8x128xf32>
    %28 = arith.addf %25, %27 : vector<8x128xf32>
    %c0_20 = arith.constant 0 : index
    %c0_21 = arith.constant 0 : index
    %29 = vector.load %arg9[%c0_20, %c0_21] : memref<8x128xf32, #tpu.memory_space<vmem>>, vector<8x128xf32>
    tpu.vector_store %arg9[%c0_20, %c0_21], %28 {strides = array<i32>} : memref<8x128xf32, #tpu.memory_space<vmem>>, vector<8x128xf32>,
    return
  }
  func.func @transform_0(%arg0: i32) -> (i32, i32) {
    %c0_i32 = arith.constant 0 : i32
    %c0_i32_0 = arith.constant 0 : i32
    return %arg0, %c0_i32 : i32, i32
  }
  func.func @transform_1(%arg0: i32) -> (i32, i32) {
    %c0_i32 = arith.constant 0 : i32
    return %arg0, %arg0 : i32, i32
  }
  func.func @transform_2(%arg0: i32) -> (i32, i32) {
    %c0_i32 = arith.constant 0 : i32
    %c0_i32_0 = arith.constant 0 : i32
    %c0_i32_1 = arith.constant 0 : i32
    return %c0_i32, %c0_i32_0 : i32, i32
  }
  func.func @transform_3(%arg0: i32) -> (i32, i32) {
    %c0_i32 = arith.constant 0 : i32
    %c0_i32_0 = arith.constant 0 : i32
    %c0_i32_1 = arith.constant 0 : i32
    return %c0_i32, %c0_i32_0 : i32, i32
  }
  func.func @transform_4(%arg0: i32) -> (i32, i32) {
    %c0_i32 = arith.constant 0 : i32
    %c0_i32_0 = arith.constant 0 : i32
    %c0_i32_1 = arith.constant 0 : i32
    return %c0_i32, %c0_i32_0 : i32, i32
  }
  func.func @transform_5(%arg0: i32) -> (i32, i32) {
    %c0_i32 = arith.constant 0 : i32
    %c0_i32_0 = arith.constant 0 : i32
    %c0_i32_1 = arith.constant 0 : i32
    return %c0_i32, %c0_i32_0 : i32, i32
  }
  func.func @transform_6(%arg0: i32) -> (i32, i32) {
    %c0_i32 = arith.constant 0 : i32
    %c0_i32_0 = arith.constant 0 : i32
    %c0_i32_1 = arith.constant 0 : i32
    return %c0_i32, %c0_i32_0 : i32, i32
  }
  func.func @transform_7(%arg0: i32) -> (i32, i32) {
    %c0_i32 = arith.constant 0 : i32
    %c0_i32_0 = arith.constant 0 : i32
    return %arg0, %c0_i32 : i32, i32
  }
  func.func @transform_8(%arg0: i32) -> (i32, i32) {
    %c0_i32 = arith.constant 0 : i32
    %c0_i32_0 = arith.constant 0 : i32
    return %arg0, %c0_i32 : i32, i32
  }
}

</mosaic_0001>

<llo_original>
// kernel: net_forward.1
$region0: #{net_forward.1}
  #allocation0 [shape = 'u32[]', space=smem, size = 0x4, offset = 0x4, fixed_abs, tag = 'smem constant byte address 0x4 - core index']
  #allocation1 [shape = 'u32[144,128]{1,0:T(1,128)}', space=vmem, size = 0x12000, scoped, tag = 'internal scratch']
  %s0 = inlined_call_operand.vmem [shape: s32[256,1], index: 0, kind: input, shape index: {}]
  %s1 = inlined_call_operand.vmem [shape: f32[16,256], index: 1, kind: input, shape index: {}]
  %s2 = inlined_call_operand.vmem [shape: f32[128,128], index: 2, kind: input, shape index: {}]
  %s3 = inlined_call_operand.vmem [shape: bf16[128,128], index: 3, kind: input, shape index: {}]
  %s4 = inlined_call_operand.vmem [shape: f32[1,128], index: 4, kind: input, shape index: {}]
  %s5 = inlined_call_operand.vmem [shape: f32[128,128], index: 5, kind: input, shape index: {}]
  %s6 = inlined_call_operand.vmem [shape: f32[1,128], index: 6, kind: input, shape index: {}]
  %s7 = inlined_call_operand.vmem [shape: u32[16,128], index: 7, kind: input, shape index: {}]
  %s8 = inlined_call_operand.vmem [shape: f32[16,128], index: 8, kind: output, shape index: {}]
  %s9 = sld [smem:[#allocation0]]
  $region65: #{net_forward.1} parent=0
    _
  %s11 = ssub.s32 1, %s9
  %s12 = scalar_select 0, %s11, %s9
  loop: start=0, step=1, limit=4
  $region2: #{net_forward.1} parent=0 // loop_pre_header
    _
  $region3: #{net_forward.1} parent=0 // loop_header
    %s14 = sphi 0, %s18
    %p15 = scmp.ge.s32.totalorder %s14, 4
    %s24 = sphi 0, %s26
    %s27 = sphi 0, %s24
    %s28 = sphi 0, %s27
    %s44 = sphi 0, %s28
    %s52 = sphi 0, %s54
    %s55 = sphi 0, %s52
    %s56 = sphi 0, %s55
    %s72 = sphi 0, %s56
    %s76 = sphi 0, %s76
    %s78 = sphi 0, %s76
    %s79 = sphi 0, %s78
    %s93 = sphi 0, %s79
    %s97 = sphi 0, %s97
    %s99 = sphi 0, %s97
    %s100 = sphi 0, %s99
    %s114 = sphi 0, %s100
    %s118 = sphi 0, %s118
    %s120 = sphi 0, %s118
    %s121 = sphi 0, %s120
    %s135 = sphi 0, %s121
    %s139 = sphi 0, %s139
    %s141 = sphi 0, %s139
    %s142 = sphi 0, %s141
    %s156 = sphi 0, %s142
    %s160 = sphi 0, %s160
    %s162 = sphi 0, %s160
    %s163 = sphi 0, %s162
    %s177 = sphi 0, %s163
    %s183 = sphi 0, %s185
    %s186 = sphi 0, %s183
    %s187 = sphi 0, %s186
    %s203 = sphi 0, %s187
    %s209 = sphi 0, %s211
    %s212 = sphi 0, %s209
    %s213 = sphi 0, %s212
    %s229 = sphi 0, %s213
  $region4: #{net_forward.1} parent=0 // loop_header_branch
    %17 = sbr.rel (%p15) target = $region8
  $region5: #{net_forward.1} parent=0 // loop_body
    %s19 = ssub.s32 %s14, 1
    %s20 = ssub.s32 %s14, 2
    %s21 = sadd.s32 %s14, 1
    %s22 = ssub.s32 %s14, %s21
    %p23 = scmp.eq.s32.totalorder %s22, 0
    %s25 = sadd.s32 %s24, 1
    %s26 = scalar_select %p23, %s24, %s25
    %p29 = pneg %p23
    %p30 = scmp.eq.s32.totalorder %s14, 1
    %p31 = por %p29, %p30
    %p32 = scmp.ne.s32.totalorder %s24, %s27
    %p33 = scmp.eq.s32.totalorder %s14, 0
    %p34 = por %p32, %p33
    %p35 = scmp.ne.s32.totalorder %s24, %s27
    %p36 = scmp.eq.s32.totalorder %s19, 1
    %p37 = por %p35, %p36
    %p38 = scmp.ne.s32.totalorder %s27, %s28
    %p39 = scmp.eq.s32.totalorder %s19, 0
    %p40 = por %p38, %p39
    %p41 = scmp.ne.s32.totalorder %s27, %s28
    %p42 = scmp.eq.s32.totalorder %s20, 1
    %p43 = por %p41, %p42
    %p45 = scmp.ne.s32.totalorder %s28, %s44
    %p46 = scmp.eq.s32.totalorder %s20, 0
    %p47 = por %p45, %p46
    %s48 = ssub.s32 %s14, %s21
    %s49 = ssub.s32 %s14, %s21
    %s50 = sor.u32 %s48, %s49
    %p51 = scmp.eq.s32.totalorder %s50, 0
    %s53 = sadd.s32 %s52, 1
    %s54 = scalar_select %p51, %s52, %s53
    %p57 = pneg %p51
    %p58 = scmp.eq.s32.totalorder %s14, 1
    %p59 = por %p57, %p58
    %p60 = scmp.ne.s32.totalorder %s52, %s55
    %p61 = scmp.eq.s32.totalorder %s14, 0
    %p62 = por %p60, %p61
    %p63 = scmp.ne.s32.totalorder %s52, %s55
    %p64 = scmp.eq.s32.totalorder %s19, 1
    %p65 = por %p63, %p64
    %p66 = scmp.ne.s32.totalorder %s55, %s56
    %p67 = scmp.eq.s32.totalorder %s19, 0
    %p68 = por %p66, %p67
    %p69 = scmp.ne.s32.totalorder %s55, %s56
    %p70 = scmp.eq.s32.totalorder %s20, 1
    %p71 = por %p69, %p70
    %p73 = scmp.ne.s32.totalorder %s56, %s72
    %p74 = scmp.eq.s32.totalorder %s20, 0
    %p75 = por %p73, %p74
    %s77 = sadd.s32 %s76, 1
    %p80 = scmp.eq.s32.totalorder %s14, 1
    %p81 = scmp.ne.s32.totalorder %s76, %s78
    %p82 = scmp.eq.s32.totalorder %s14, 0
    %p83 = por %p81, %p82
    %p84 = scmp.ne.s32.totalorder %s76, %s78
    %p85 = scmp.eq.s32.totalorder %s19, 1
    %p86 = por %p84, %p85
    %p87 = scmp.ne.s32.totalorder %s78, %s79
    %p88 = scmp.eq.s32.totalorder %s19, 0
    %p89 = por %p87, %p88
    %p90 = scmp.ne.s32.totalorder %s78, %s79
    %p91 = scmp.eq.s32.totalorder %s20, 1
    %p92 = por %p90, %p91
    %p94 = scmp.ne.s32.totalorder %s79, %s93
    %p95 = scmp.eq.s32.totalorder %s20, 0
    %p96 = por %p94, %p95
    %s98 = sadd.s32 %s97, 1
    %p101 = scmp.eq.s32.totalorder %s14, 1
    %p102 = scmp.ne.s32.totalorder %s97, %s99
    %p103 = scmp.eq.s32.totalorder %s14, 0
    %p104 = por %p102, %p103
    %p105 = scmp.ne.s32.totalorder %s97, %s99
    %p106 = scmp.eq.s32.totalorder %s19, 1
    %p107 = por %p105, %p106
    %p108 = scmp.ne.s32.totalorder %s99, %s100
    %p109 = scmp.eq.s32.totalorder %s19, 0
    %p110 = por %p108, %p109
    %p111 = scmp.ne.s32.totalorder %s99, %s100
    %p112 = scmp.eq.s32.totalorder %s20, 1
    %p113 = por %p111, %p112
    %p115 = scmp.ne.s32.totalorder %s100, %s114
    %p116 = scmp.eq.s32.totalorder %s20, 0
    %p117 = por %p115, %p116
    %s119 = sadd.s32 %s118, 1
    %p122 = scmp.eq.s32.totalorder %s14, 1
    %p123 = scmp.ne.s32.totalorder %s118, %s120
    %p124 = scmp.eq.s32.totalorder %s14, 0
    %p125 = por %p123, %p124
    %p126 = scmp.ne.s32.totalorder %s118, %s120
    %p127 = scmp.eq.s32.totalorder %s19, 1
    %p128 = por %p126, %p127
    %p129 = scmp.ne.s32.totalorder %s120, %s121
    %p130 = scmp.eq.s32.totalorder %s19, 0
    %p131 = por %p129, %p130
    %p132 = scmp.ne.s32.totalorder %s120, %s121
    %p133 = scmp.eq.s32.totalorder %s20, 1
    %p134 = por %p132, %p133
    %p136 = scmp.ne.s32.totalorder %s121, %s135
    %p137 = scmp.eq.s32.totalorder %s20, 0
    %p138 = por %p136, %p137
    %s140 = sadd.s32 %s139, 1
    %p143 = scmp.eq.s32.totalorder %s14, 1
    %p144 = scmp.ne.s32.totalorder %s139, %s141
    %p145 = scmp.eq.s32.totalorder %s14, 0
    %p146 = por %p144, %p145
    %p147 = scmp.ne.s32.totalorder %s139, %s141
    %p148 = scmp.eq.s32.totalorder %s19, 1
    %p149 = por %p147, %p148
    %p150 = scmp.ne.s32.totalorder %s141, %s142
    %p151 = scmp.eq.s32.totalorder %s19, 0
    %p152 = por %p150, %p151
    %p153 = scmp.ne.s32.totalorder %s141, %s142
    %p154 = scmp.eq.s32.totalorder %s20, 1
    %p155 = por %p153, %p154
    %p157 = scmp.ne.s32.totalorder %s142, %s156
    %p158 = scmp.eq.s32.totalorder %s20, 0
    %p159 = por %p157, %p158
    %s161 = sadd.s32 %s160, 1
    %p164 = scmp.eq.s32.totalorder %s14, 1
    %p165 = scmp.ne.s32.totalorder %s160, %s162
    %p166 = scmp.eq.s32.totalorder %s14, 0
    %p167 = por %p165, %p166
    %p168 = scmp.ne.s32.totalorder %s160, %s162
    %p169 = scmp.eq.s32.totalorder %s19, 1
    %p170 = por %p168, %p169
    %p171 = scmp.ne.s32.totalorder %s162, %s163
    %p172 = scmp.eq.s32.totalorder %s19, 0
    %p173 = por %p171, %p172
    %p174 = scmp.ne.s32.totalorder %s162, %s163
    %p175 = scmp.eq.s32.totalorder %s20, 1
    %p176 = por %p174, %p175
    %p178 = scmp.ne.s32.totalorder %s163, %s177
    %p179 = scmp.eq.s32.totalorder %s20, 0
    %p180 = por %p178, %p179
    %s181 = ssub.s32 %s14, %s21
    %p182 = scmp.eq.s32.totalorder %s181, 0
    %s184 = sadd.s32 %s183, 1
    %s185 = scalar_select %p182, %s183, %s184
    %p188 = pneg %p182
    %p189 = scmp.eq.s32.totalorder %s14, 1
    %p190 = por %p188, %p189
    %p191 = scmp.ne.s32.totalorder %s183, %s186
    %p192 = scmp.eq.s32.totalorder %s14, 0
    %p193 = por %p191, %p192
    %p194 = scmp.ne.s32.totalorder %s183, %s186
    %p195 = scmp.eq.s32.totalorder %s19, 1
    %p196 = por %p194, %p195
    %p197 = scmp.ne.s32.totalorder %s186, %s187
    %p198 = scmp.eq.s32.totalorder %s19, 0
    %p199 = por %p197, %p198
    %p200 = scmp.ne.s32.totalorder %s186, %s187
    %p201 = scmp.eq.s32.totalorder %s20, 1
    %p202 = por %p200, %p201
    %p204 = scmp.ne.s32.totalorder %s187, %s203
    %p205 = scmp.eq.s32.totalorder %s20, 0
    %p206 = por %p204, %p205
    %s207 = ssub.s32 %s14, %s21
    %p208 = scmp.eq.s32.totalorder %s207, 0
    %s210 = sadd.s32 %s209, 1
    %s211 = scalar_select %p208, %s209, %s210
    %p214 = pneg %p208
    %p215 = scmp.eq.s32.totalorder %s14, 1
    %p216 = por %p214, %p215
    %p217 = scmp.ne.s32.totalorder %s209, %s212
    %p218 = scmp.eq.s32.totalorder %s14, 0
    %p219 = por %p217, %p218
    %p220 = scmp.ne.s32.totalorder %s209, %s212
    %p221 = scmp.eq.s32.totalorder %s19, 1
    %p222 = por %p220, %p221
    %p223 = scmp.ne.s32.totalorder %s212, %s213
    %p224 = scmp.eq.s32.totalorder %s19, 0
    %p225 = por %p223, %p224
    %p226 = scmp.ne.s32.totalorder %s212, %s213
    %p227 = scmp.eq.s32.totalorder %s20, 1
    %p228 = por %p226, %p227
    %p230 = scmp.ne.s32.totalorder %s213, %s229
    %p231 = scmp.eq.s32.totalorder %s20, 0
    %p232 = por %p230, %p231
    %p233 = scmp.le.s32.totalorder 1, %s14
    %p234 = scmp.lt.s32.totalorder %s14, 3
    %p235 = pnand %p233, %p234
    %p236 = pneg %p235
    // Predicated region
    $region9: #{net_forward.1} parent=5 // pred_check
      _
    $region10: #{net_forward.1} parent=5 // pred_check_branch
      %238 = sbr.rel (%p235) target = $region12
    $region11: #{net_forward.1} parent=5 // pred_region
      %s239 = ssub.s32 %s14, 1
      // Predicated region
      $region13: #{net_forward.1} parent=11 // pred_check
        %p240 = pneg %p89
      $region14: #{net_forward.1} parent=11 // pred_check_branch
        %242 = sbr.rel (%p240) target = $region16
      $region15: #{net_forward.1} parent=11 // pred_region
        _
      $region16: #{net_forward.1} parent=11 // pred_fallthru
        _
      // Predicated region
      $region17: #{net_forward.1} parent=11 // pred_check
        %p243 = pneg %p110
      $region18: #{net_forward.1} parent=11 // pred_check_branch
        %245 = sbr.rel (%p243) target = $region20
      $region19: #{net_forward.1} parent=11 // pred_region
        _
      $region20: #{net_forward.1} parent=11 // pred_fallthru
        _
      // Predicated region
      $region21: #{net_forward.1} parent=11 // pred_check
        %p246 = pneg %p131
      $region22: #{net_forward.1} parent=11 // pred_check_branch
        %248 = sbr.rel (%p246) target = $region24
      $region23: #{net_forward.1} parent=11 // pred_region
        _
      $region24: #{net_forward.1} parent=11 // pred_fallthru
        _
      // Predicated region
      $region25: #{net_forward.1} parent=11 // pred_check
        %p249 = pneg %p152
      $region26: #{net_forward.1} parent=11 // pred_check_branch
        %251 = sbr.rel (%p249) target = $region28
      $region27: #{net_forward.1} parent=11 // pred_region
        _
      $region28: #{net_forward.1} parent=11 // pred_fallthru
        _
      // Predicated region
      $region29: #{net_forward.1} parent=11 // pred_check
        %p252 = pneg %p173
      $region30: #{net_forward.1} parent=11 // pred_check_branch
        %254 = sbr.rel (%p252) target = $region32
      $region31: #{net_forward.1} parent=11 // pred_region
        _
      $region32: #{net_forward.1} parent=11 // pred_fallthru
        _
    $region12: #{net_forward.1} parent=5 // pred_fallthru
      _
    %p255 = scmp.lt.s32.totalorder %s14, 2
    // Predicated region
    $region33: #{net_forward.1} parent=5 // pred_check
      %p256 = pneg %p255
    $region34: #{net_forward.1} parent=5 // pred_check_branch
      %258 = sbr.rel (%p256) target = $region36
    $region35: #{net_forward.1} parent=5 // pred_region
      // Predicated region
      $region37: #{net_forward.1} parent=35 // pred_check
        %p259 = pneg %p34
      $region38: #{net_forward.1} parent=35 // pred_check_branch
        %261 = sbr.rel (%p259) target = $region40
      $region39: #{net_forward.1} parent=35 // pred_region
        %s262 = smul.u32 16, %s14
        %p263 = scmp.lt.s32.totalorder %s262, 31
        %s264 = scalar_select %p263, %s262, 31
        %s265 = smul.addr %s264, 8
        %s266 = scalar_lea.vmem %s0, %s265
        %s267 = smul.u32 16, %s14
      $region40: #{net_forward.1} parent=35 // pred_fallthru
        _
      // Predicated region
      $region41: #{net_forward.1} parent=35 // pred_check
        %p268 = pneg %p62
      $region42: #{net_forward.1} parent=35 // pred_check_branch
        %270 = sbr.rel (%p268) target = $region44
      $region43: #{net_forward.1} parent=35 // pred_region
        %p271 = scmp.lt.s32.totalorder %s14, 1
        %s272 = scalar_select %p271, %s14, 1
        %p273 = scmp.lt.s32.totalorder %s14, 1
        %s274 = scalar_select %p273, %s14, 1
        %s275 = smul.addr %s272, 2
        %s276 = sadd.s32 %s274, %s275
        %s277 = smul.addr %s276, 8
        %s278 = scalar_lea.vmem %s1, %s277
      $region44: #{net_forward.1} parent=35 // pred_fallthru
        _
      // Predicated region
      $region45: #{net_forward.1} parent=35 // pred_check
        %p279 = pneg %p193
      $region46: #{net_forward.1} parent=35 // pred_check_branch
        %281 = sbr.rel (%p279) target = $region48
      $region47: #{net_forward.1} parent=35 // pred_region
        %p282 = scmp.lt.s32.totalorder %s14, 1
        %s283 = scalar_select %p282, %s14, 1
        %s284 = smul.addr %s283, 8
        %s285 = scalar_lea.vmem %s7, %s284
      $region48: #{net_forward.1} parent=35 // pred_fallthru
        _
    $region36: #{net_forward.1} parent=5 // pred_fallthru
      _
    %p286 = scmp.le.s32.totalorder 1, %s14
    %p287 = scmp.lt.s32.totalorder %s14, 3
    %p288 = pnand %p286, %p287
    %p289 = pneg %p288
    // Predicated region
    $region49: #{net_forward.1} parent=5 // pred_check
      _
    $region50: #{net_forward.1} parent=5 // pred_check_branch
      %291 = sbr.rel (%p288) target = $region52
    $region51: #{net_forward.1} parent=5 // pred_region
      %s292 = ssub.s32 %s14, 1
      %s293 = smul.u32 16, %s19
      %p294 = scmp.lt.s32.totalorder %s293, 31
      %s295 = scalar_select %p294, %s293, 31
      %s296 = smul.addr %s295, 8
      %s297 = scalar_lea.vmem %s0, %s296
      %p298 = pneg %p40
      %p299 = pneg %p37
      %p300 = scmp.lt.s32.totalorder %s19, 1
      %s301 = scalar_select %p300, %s19, 1
      %p302 = scmp.lt.s32.totalorder %s19, 1
      %s303 = scalar_select %p302, %s19, 1
      %s304 = smul.addr %s301, 2
      %s305 = sadd.s32 %s303, %s304
      %s306 = smul.addr %s305, 8
      %s307 = scalar_lea.vmem %s1, %s306
      %p308 = pneg %p68
      %p309 = pneg %p65
      %p310 = pneg %p89
      %p311 = pneg %p86
      %p312 = pneg %p110
      %p313 = pneg %p107
      %p314 = pneg %p131
      %p315 = pneg %p128
      %p316 = pneg %p152
      %p317 = pneg %p149
      %p318 = pneg %p173
      %p319 = pneg %p170
      %p320 = scmp.lt.s32.totalorder %s19, 1
      %s321 = scalar_select %p320, %s19, 1
      %s322 = smul.addr %s321, 8
      %s323 = scalar_lea.vmem %s7, %s322
      %p324 = pneg %p199
      %p325 = pneg %p196
      %p326 = pneg %p225
      %p327 = pneg %p222
      %p328 = scmp.lt.s32.totalorder %s19, 1
      %s329 = scalar_select %p328, %s19, 1
      %s330 = smul.addr %s329, 8
      %s331 = scalar_lea.vmem %s8, %s330
      %s332 = smul.u32 16, %s19
      %p333 = scmp.lt.s32.totalorder %s332, 31
      %s334 = scalar_select %p333, %s332, 31
      %s335 = smul.addr %s334, 8
      %s336 = scalar_lea.vmem %s0, %s335
      %s337 = smul.u32 16, %s19
      %p338 = scmp.lt.s32.totalorder %s19, 1
      %s339 = scalar_select %p338, %s19, 1
      %p340 = scmp.lt.s32.totalorder %s19, 1
      %s341 = scalar_select %p340, %s19, 1
      %s342 = smul.addr %s339, 2
      %s343 = sadd.s32 %s341, %s342
      %s344 = smul.addr %s343, 8
      %s345 = scalar_lea.vmem %s1, %s344
      %p346 = scmp.lt.s32.totalorder %s19, 1
      %s347 = scalar_select %p346, %s19, 1
      %s348 = smul.addr %s347, 8
      %s349 = scalar_lea.vmem %s7, %s348
      %p350 = scmp.lt.s32.totalorder %s19, 1
      %s351 = scalar_select %p350, %s19, 1
      %s352 = smul.addr %s351, 8
      %s353 = scalar_lea.vmem %s8, %s352
      %v355 = vld [vmem:[%s336] sm:$0xff]
      %v356 = vld [vmem:[%s336 + $0x8] sm:$0xff]
      %v357 = vld [vmem:[%s336 + $0x10] sm:$0xff]
      %v358 = vld [vmem:[%s336 + $0x18] sm:$0xff]
      %v359 = vld [vmem:[%s336 + $0x20] sm:$0xff]
      %v360 = vld [vmem:[%s336 + $0x28] sm:$0xff]
      %v361 = vld [vmem:[%s336 + $0x30] sm:$0xff]
      %v362 = vld [vmem:[%s336 + $0x38] sm:$0xff]
      %v363 = vld [vmem:[%s336 + $0x40] sm:$0xff]
      %v364 = vld [vmem:[%s336 + $0x48] sm:$0xff]
      %v365 = vld [vmem:[%s336 + $0x50] sm:$0xff]
      %v366 = vld [vmem:[%s336 + $0x58] sm:$0xff]
      %v367 = vld [vmem:[%s336 + $0x60] sm:$0xff]
      %v368 = vld [vmem:[%s336 + $0x68] sm:$0xff]
      %v369 = vld [vmem:[%s336 + $0x70] sm:$0xff]
      %v370 = vld [vmem:[%s336 + $0x78] sm:$0xff]
      %v371 = vlaneseq
      %v372 = vand.u32 %v371, 127
      %373 = vset.pattern.permute.xlu0 0
      %374 = vperm.xlu0 %373, %v355
      %v375 = vpop.permute.xlu0 %374
      %376 = vset.pattern.permute.xlu0 0
      %377 = vperm.xlu0 %376, %v356
      %v378 = vpop.permute.xlu0 %377
      %379 = vset.pattern.permute.xlu0 0
      %380 = vperm.xlu0 %379, %v357
      %v381 = vpop.permute.xlu0 %380
      %382 = vset.pattern.permute.xlu0 0
      %383 = vperm.xlu0 %382, %v358
      %v384 = vpop.permute.xlu0 %383
      %385 = vset.pattern.permute.xlu0 0
      %386 = vperm.xlu0 %385, %v359
      %v387 = vpop.permute.xlu0 %386
      %388 = vset.pattern.permute.xlu0 0
      %389 = vperm.xlu0 %388, %v360
      %v390 = vpop.permute.xlu0 %389
      %391 = vset.pattern.permute.xlu0 0
      %392 = vperm.xlu0 %391, %v361
      %v393 = vpop.permute.xlu0 %392
      %394 = vset.pattern.permute.xlu0 0
      %395 = vperm.xlu0 %394, %v362
      %v396 = vpop.permute.xlu0 %395
      %397 = vset.pattern.permute.xlu0 0
      %398 = vperm.xlu0 %397, %v363
      %v399 = vpop.permute.xlu0 %398
      %400 = vset.pattern.permute.xlu0 0
      %401 = vperm.xlu0 %400, %v364
      %v402 = vpop.permute.xlu0 %401
      %403 = vset.pattern.permute.xlu0 0
      %404 = vperm.xlu0 %403, %v365
      %v405 = vpop.permute.xlu0 %404
      %406 = vset.pattern.permute.xlu0 0
      %407 = vperm.xlu0 %406, %v366
      %v408 = vpop.permute.xlu0 %407
      %409 = vset.pattern.permute.xlu0 0
      %410 = vperm.xlu0 %409, %v367
      %v411 = vpop.permute.xlu0 %410
      %412 = vset.pattern.permute.xlu0 0
      %413 = vperm.xlu0 %412, %v368
      %v414 = vpop.permute.xlu0 %413
      %415 = vset.pattern.permute.xlu0 0
      %416 = vperm.xlu0 %415, %v369
      %v417 = vpop.permute.xlu0 %416
      %418 = vset.pattern.permute.xlu0 0
      %419 = vperm.xlu0 %418, %v370
      %v420 = vpop.permute.xlu0 %419
      %vm421 = vcmp.eq.s32.totalorder %v372, %v375
      %vm422 = vcmp.eq.s32.totalorder %v372, %v378
      %vm423 = vcmp.eq.s32.totalorder %v372, %v381
      %vm424 = vcmp.eq.s32.totalorder %v372, %v384
      %vm425 = vcmp.eq.s32.totalorder %v372, %v387
      %vm426 = vcmp.eq.s32.totalorder %v372, %v390
      %vm427 = vcmp.eq.s32.totalorder %v372, %v393
      %vm428 = vcmp.eq.s32.totalorder %v372, %v396
      %vm429 = vcmp.eq.s32.totalorder %v372, %v399
      %vm430 = vcmp.eq.s32.totalorder %v372, %v402
      %vm431 = vcmp.eq.s32.totalorder %v372, %v405
      %vm432 = vcmp.eq.s32.totalorder %v372, %v408
      %vm433 = vcmp.eq.s32.totalorder %v372, %v411
      %vm434 = vcmp.eq.s32.totalorder %v372, %v414
      %vm435 = vcmp.eq.s32.totalorder %v372, %v417
      %vm436 = vcmp.eq.s32.totalorder %v372, %v420
      %v437 = vsel %vm421, 1, 0
      %v438 = vsel %vm422, 1, 0
      %v439 = vsel %vm423, 1, 0
      %v440 = vsel %vm424, 1, 0
      %v441 = vsel %vm425, 1, 0
      %v442 = vsel %vm426, 1, 0
      %v443 = vsel %vm427, 1, 0
      %v444 = vsel %vm428, 1, 0
      %v445 = vsel %vm429, 1, 0
      %v446 = vsel %vm430, 1, 0
      %v447 = vsel %vm431, 1, 0
      %v448 = vsel %vm432, 1, 0
      %v449 = vsel %vm433, 1, 0
      %v450 = vsel %vm434, 1, 0
      %v451 = vsel %vm435, 1, 0
      %v452 = vsel %vm436, 1, 0
      %v453 = vcvt.s32.f32 %v437
      %v454 = vcvt.s32.f32 %v438
      %v455 = vcvt.s32.f32 %v439
      %v456 = vcvt.s32.f32 %v440
      %v457 = vcvt.s32.f32 %v441
      %v458 = vcvt.s32.f32 %v442
      %v459 = vcvt.s32.f32 %v443
      %v460 = vcvt.s32.f32 %v444
      %v461 = vcvt.s32.f32 %v445
      %v462 = vcvt.s32.f32 %v446
      %v463 = vcvt.s32.f32 %v447
      %v464 = vcvt.s32.f32 %v448
      %v465 = vcvt.s32.f32 %v449
      %v466 = vcvt.s32.f32 %v450
      %v467 = vcvt.s32.f32 %v451
      %v468 = vcvt.s32.f32 %v452
      %v469 = vld [vmem:[%s2] sm:$0xff]
      %v470 = vld [vmem:[%s2 + $0x8] sm:$0xff]
      %v471 = vld [vmem:[%s2 + $0x10] sm:$0xff]
      %v472 = vld [vmem:[%s2 + $0x18] sm:$0xff]
      %v473 = vld [vmem:[%s2 + $0x20] sm:$0xff]
      %v474 = vld [vmem:[%s2 + $0x28] sm:$0xff]
      %v475 = vld [vmem:[%s2 + $0x30] sm:$0xff]
      %v476 = vld [vmem:[%s2 + $0x38] sm:$0xff]
      %v477 = vld [vmem:[%s2 + $0x40] sm:$0xff]
      %v478 = vld [vmem:[%s2 + $0x48] sm:$0xff]
      %v479 = vld [vmem:[%s2 + $0x50] sm:$0xff]
      %v480 = vld [vmem:[%s2 + $0x58] sm:$0xff]
      %v481 = vld [vmem:[%s2 + $0x60] sm:$0xff]
      %v482 = vld [vmem:[%s2 + $0x68] sm:$0xff]
      %v483 = vld [vmem:[%s2 + $0x70] sm:$0xff]
      %v484 = vld [vmem:[%s2 + $0x78] sm:$0xff]
      %485 = vmatprep.subr.mxu0 0.0
      %486 = vmatpush1.msra.mxu0 %v469
      %487 = vmatprep.subr.mxu0 0.0
      %488 = vmatpush1.msra.mxu0 %v470
      %489 = vmatprep.subr.mxu0 0.0
      %490 = vmatpush1.msra.mxu0 %v471
      %491 = vmatprep.subr.mxu0 0.0
      %492 = vmatpush1.msra.mxu0 %v472
      %493 = vmatprep.subr.mxu0 0.0
      %494 = vmatpush1.msra.mxu0 %v473
      %495 = vmatprep.subr.mxu0 0.0
      %496 = vmatpush1.msra.mxu0 %v474
      %497 = vmatprep.subr.mxu0 0.0
      %498 = vmatpush1.msra.mxu0 %v475
      %499 = vmatprep.subr.mxu0 0.0
      %500 = vmatpush1.msra.mxu0 %v476
      %501 = vmatprep.subr.mxu0 0.0
      %502 = vmatpush1.msra.mxu0 %v477
      %503 = vmatprep.subr.mxu0 0.0
      %504 = vmatpush1.msra.mxu0 %v478
      %505 = vmatprep.subr.mxu0 0.0
      %506 = vmatpush1.msra.mxu0 %v479
      %507 = vmatprep.subr.mxu0 0.0
      %508 = vmatpush1.msra.mxu0 %v480
      %509 = vmatprep.subr.mxu0 0.0
      %510 = vmatpush1.msra.mxu0 %v481
      %511 = vmatprep.subr.mxu0 0.0
      %512 = vmatpush1.msra.mxu0 %v482
      %513 = vmatprep.subr.mxu0 0.0
      %514 = vmatpush1.msra.mxu0 %v483
      %515 = vmatprep.subr.mxu0 0.0
      %516 = vmatpush1.msra.mxu0 %v484
      %517 = vmatprep.subr.mxu0 0.0
      %518 = vmatpush1.msra.mxu0 0.0
      %519 = vmatprep.subr.mxu0 0.0
      %520 = vmatpush1.msra.mxu0 0.0
      %521 = vmatprep.subr.mxu0 0.0
      %522 = vmatpush1.msra.mxu0 0.0
      %523 = vmatprep.subr.mxu0 0.0
      %524 = vmatpush1.msra.mxu0 0.0
      %525 = vmatprep.subr.mxu0 0.0
      %526 = vmatpush1.msra.mxu0 0.0
      %527 = vmatprep.subr.mxu0 0.0
      %528 = vmatpush1.msra.mxu0 0.0
      %529 = vmatprep.subr.mxu0 0.0
      %530 = vmatpush1.msra.mxu0 0.0
      %531 = vmatprep.subr.mxu0 0.0
      %532 = vmatpush1.msra.mxu0 0.0
      %533 = vmatprep.subr.mxu0 0.0
      %534 = vmatpush1.msra.mxu0 0.0
      %535 = vmatprep.subr.mxu0 0.0
      %536 = vmatpush1.msra.mxu0 0.0
      %537 = vmatprep.subr.mxu0 0.0
      %538 = vmatpush1.msra.mxu0 0.0
      %539 = vmatprep.subr.mxu0 0.0
      %540 = vmatpush1.msra.mxu0 0.0
      %541 = vmatprep.subr.mxu0 0.0
      %542 = vmatpush1.msra.mxu0 0.0
      %543 = vmatprep.subr.mxu0 0.0
      %544 = vmatpush1.msra.mxu0 0.0
      %545 = vmatprep.subr.mxu0 0.0
      %546 = vmatpush1.msra.mxu0 0.0
      %547 = vmatprep.subr.mxu0 0.0
      %548 = vmatpush1.msra.mxu0 0.0
      %549 = vmatprep.mubr.f32.mxu0 0.0
      %550 = vmatmul.mubr.f32.gmra.mrb[0].mxu0 %v453
      %v551 = vpop.f32.mrb[0].mxu0
      %v552 = vadd.f32 0.0, %v551
      %v553 = vpop.f32.mrb[0].mxu0
      %554 = vmatprep.mubr.f32.mxu0 0.0
      %555 = vmatmul.mubr.f32.gmra.mrb[0].mxu0 %v454
      %v556 = vpop.f32.mrb[0].mxu0
      %v557 = vadd.f32 0.0, %v556
      %v558 = vpop.f32.mrb[0].mxu0
      %559 = vmatprep.mubr.f32.mxu0 0.0
      %560 = vmatmul.mubr.f32.gmra.mrb[0].mxu0 %v455
      %v561 = vpop.f32.mrb[0].mxu0
      %v562 = vadd.f32 0.0, %v561
      %v563 = vpop.f32.mrb[0].mxu0
      %564 = vmatprep.mubr.f32.mxu0 0.0
      %565 = vmatmul.mubr.f32.gmra.mrb[0].mxu0 %v456
      %v566 = vpop.f32.mrb[0].mxu0
      %v567 = vadd.f32 0.0, %v566
      %v568 = vpop.f32.mrb[0].mxu0
      %569 = vmatprep.mubr.f32.mxu0 0.0
      %570 = vmatmul.mubr.f32.gmra.mrb[0].mxu0 %v457
      %v571 = vpop.f32.mrb[0].mxu0
      %v572 = vadd.f32 0.0, %v571
      %v573 = vpop.f32.mrb[0].mxu0
      %574 = vmatprep.mubr.f32.mxu0 0.0
      %575 = vmatmul.mubr.f32.gmra.mrb[0].mxu0 %v458
      %v576 = vpop.f32.mrb[0].mxu0
      %v577 = vadd.f32 0.0, %v576
      %v578 = vpop.f32.mrb[0].mxu0
      %579 = vmatprep.mubr.f32.mxu0 0.0
      %580 = vmatmul.mubr.f32.gmra.mrb[0].mxu0 %v459
      %v581 = vpop.f32.mrb[0].mxu0
      %v582 = vadd.f32 0.0, %v581
      %v583 = vpop.f32.mrb[0].mxu0
      %584 = vmatprep.mubr.f32.mxu0 0.0
      %585 = vmatmul.mubr.f32.gmra.mrb[0].mxu0 %v460
      %v586 = vpop.f32.mrb[0].mxu0
      %v587 = vadd.f32 0.0, %v586
      %v588 = vpop.f32.mrb[0].mxu0
      %589 = vmatprep.mubr.f32.mxu0 0.0
      %590 = vmatmul.mubr.f32.gmra.mrb[0].mxu0 %v461
      %v591 = vpop.f32.mrb[0].mxu0
      %v592 = vadd.f32 0.0, %v591
      %v593 = vpop.f32.mrb[0].mxu0
      %594 = vmatprep.mubr.f32.mxu0 0.0
      %595 = vmatmul.mubr.f32.gmra.mrb[0].mxu0 %v462
      %v596 = vpop.f32.mrb[0].mxu0
      %v597 = vadd.f32 0.0, %v596
      %v598 = vpop.f32.mrb[0].mxu0
      %599 = vmatprep.mubr.f32.mxu0 0.0
      %600 = vmatmul.mubr.f32.gmra.mrb[0].mxu0 %v463
      %v601 = vpop.f32.mrb[0].mxu0
      %v602 = vadd.f32 0.0, %v601
      %v603 = vpop.f32.mrb[0].mxu0
      %604 = vmatprep.mubr.f32.mxu0 0.0
      %605 = vmatmul.mubr.f32.gmra.mrb[0].mxu0 %v464
      %v606 = vpop.f32.mrb[0].mxu0
      %v607 = vadd.f32 0.0, %v606
      %v608 = vpop.f32.mrb[0].mxu0
      %609 = vmatprep.mubr.f32.mxu0 0.0
      %610 = vmatmul.mubr.f32.gmra.mrb[0].mxu0 %v465
      %v611 = vpop.f32.mrb[0].mxu0
      %v612 = vadd.f32 0.0, %v611
      %v613 = vpop.f32.mrb[0].mxu0
      %614 = vmatprep.mubr.f32.mxu0 0.0
      %615 = vmatmul.mubr.f32.gmra.mrb[0].mxu0 %v466
      %v616 = vpop.f32.mrb[0].mxu0
      %v617 = vadd.f32 0.0, %v616
      %v618 = vpop.f32.mrb[0].mxu0
      %619 = vmatprep.mubr.f32.mxu0 0.0
      %620 = vmatmul.mubr.f32.gmra.mrb[0].mxu0 %v467
      %v621 = vpop.f32.mrb[0].mxu0
      %v622 = vadd.f32 0.0, %v621
      %v623 = vpop.f32.mrb[0].mxu0
      %624 = vmatprep.mubr.f32.mxu0 0.0
      %625 = vmatmul.mubr.f32.gmra.mrb[0].mxu0 %v468
      %v626 = vpop.f32.mrb[0].mxu0
      %v627 = vadd.f32 0.0, %v626
      %v628 = vpop.f32.mrb[0].mxu0
      %629 = vdwg.mxu0
      %v630 = vld [vmem:[%s345] sm:$0xff]
      %631 = vmatprep.subr.mxu0 0.0
      %632 = vmatpush1.msra.mxu0 %v552
      %633 = vmatprep.subr.mxu0 0.0
      %634 = vmatpush1.msra.mxu0 %v557
      %635 = vmatprep.subr.mxu0 0.0
      %636 = vmatpush1.msra.mxu0 %v562
      %637 = vmatprep.subr.mxu0 0.0
      %638 = vmatpush1.msra.mxu0 %v567
      %639 = vmatprep.subr.mxu0 0.0
      %640 = vmatpush1.msra.mxu0 %v572
      %641 = vmatprep.subr.mxu0 0.0
      %642 = vmatpush1.msra.mxu0 %v577
      %643 = vmatprep.subr.mxu0 0.0
      %644 = vmatpush1.msra.mxu0 %v582
      %645 = vmatprep.subr.mxu0 0.0
      %646 = vmatpush1.msra.mxu0 %v587
      %647 = vmatprep.subr.mxu0 0.0
      %648 = vmatpush1.msra.mxu0 %v592
      %649 = vmatprep.subr.mxu0 0.0
      %650 = vmatpush1.msra.mxu0 %v597
      %651 = vmatprep.subr.mxu0 0.0
      %652 = vmatpush1.msra.mxu0 %v602
      %653 = vmatprep.subr.mxu0 0.0
      %654 = vmatpush1.msra.mxu0 %v607
      %655 = vmatprep.subr.mxu0 0.0
      %656 = vmatpush1.msra.mxu0 %v612
      %657 = vmatprep.subr.mxu0 0.0
      %658 = vmatpush1.msra.mxu0 %v617
      %659 = vmatprep.subr.mxu0 0.0
      %660 = vmatpush1.msra.mxu0 %v622
      %661 = vmatprep.subr.mxu0 0.0
      %662 = vmatpush1.msra.mxu0 %v627
      %663 = vmatprep.subr.mxu0 0.0
      %664 = vmatpush1.msra.mxu0 0.0
      %665 = vmatprep.subr.mxu0 0.0
      %666 = vmatpush1.msra.mxu0 0.0
      %667 = vmatprep.subr.mxu0 0.0
      %668 = vmatpush1.msra.mxu0 0.0
      %669 = vmatprep.subr.mxu0 0.0
      %670 = vmatpush1.msra.mxu0 0.0
      %671 = vmatprep.subr.mxu0 0.0
      %672 = vmatpush1.msra.mxu0 0.0
      %673 = vmatprep.subr.mxu0 0.0
      %674 = vmatpush1.msra.mxu0 0.0
      %675 = vmatprep.subr.mxu0 0.0
      %676 = vmatpush1.msra.mxu0 0.0
      %677 = vmatprep.subr.mxu0 0.0
      %678 = vmatpush1.msra.mxu0 0.0
      %679 = vmatprep.subr.mxu0 0.0
      %680 = vmatpush1.msra.mxu0 0.0
      %681 = vmatprep.subr.mxu0 0.0
      %682 = vmatpush1.msra.mxu0 0.0
      %683 = vmatprep.subr.mxu0 0.0
      %684 = vmatpush1.msra.mxu0 0.0
      %685 = vmatprep.subr.mxu0 0.0
      %686 = vmatpush1.msra.mxu0 0.0
      %687 = vmatprep.subr.mxu0 0.0
      %688 = vmatpush1.msra.mxu0 0.0
      %689 = vmatprep.subr.mxu0 0.0
      %690 = vmatpush1.msra.mxu0 0.0
      %691 = vmatprep.subr.mxu0 0.0
      %692 = vmatpush1.msra.mxu0 0.0
      %693 = vmatprep.subr.mxu0 0.0
      %694 = vmatpush1.msra.mxu0 0.0
      %695 = vmatprep.mubr.f32.mxu0 0.0
      %696 = vmatmul.mubr.f32.gmra.mrb[0].mxu0 %v630
      %v697 = vpop.f32.mrb[0].mxu0
      %v698 = vadd.f32 0.0, %v697
      %v699 = vpop.f32.mrb[0].mxu0
      %700 = vdwg.mxu0
      %v701 = vpack.c.bf16 %v698, %v698
      %v702 = vld [vmem:[%s3] sm:$0xf]
      %v703 = vld [vmem:[%s3 + $0x4] sm:$0xf]
      %v704 = vld [vmem:[%s3 + $0x8] sm:$0xf]
      %v705 = vld [vmem:[%s3 + $0xc] sm:$0xf]
      %v706 = vld [vmem:[%s3 + $0x10] sm:$0xf]
      %v707 = vld [vmem:[%s3 + $0x14] sm:$0xf]
      %v708 = vld [vmem:[%s3 + $0x18] sm:$0xf]
      %v709 = vld [vmem:[%s3 + $0x1c] sm:$0xf]
      %v710 = vld [vmem:[%s3 + $0x20] sm:$0xf]
      %v711 = vld [vmem:[%s3 + $0x24] sm:$0xf]
      %v712 = vld [vmem:[%s3 + $0x28] sm:$0xf]
      %v713 = vld [vmem:[%s3 + $0x2c] sm:$0xf]
      %v714 = vld [vmem:[%s3 + $0x30] sm:$0xf]
      %v715 = vld [vmem:[%s3 + $0x34] sm:$0xf]
      %v716 = vld [vmem:[%s3 + $0x38] sm:$0xf]
      %v717 = vld [vmem:[%s3 + $0x3c] sm:$0xf]
      %v718 = vld [vmem:[%s4] sm:$0x1]
      %v720 = vlaneseq
      %v721 = vshrl.u32 %v720, 7
      %v722 = vsub.s32 0, %v721
      %v723 = vrot.slane %v718, %v722
      %v741 = vunpack.c.l.b16 %v702
      %v742 = vunpack.c.l.b16 %v703
      %v743 = vunpack.c.l.b16 %v704
      %v744 = vunpack.c.l.b16 %v705
      %v745 = vunpack.c.l.b16 %v706
      %v746 = vunpack.c.l.b16 %v707
      %v747 = vunpack.c.l.b16 %v708
      %v748 = vunpack.c.l.b16 %v709
      %v749 = vunpack.c.l.b16 %v710
      %v750 = vunpack.c.l.b16 %v711
      %v751 = vunpack.c.l.b16 %v712
      %v752 = vunpack.c.l.b16 %v713
      %v753 = vunpack.c.l.b16 %v714
      %v754 = vunpack.c.l.b16 %v715
      %v755 = vunpack.c.l.b16 %v716
      %v756 = vunpack.c.l.b16 %v717
      %v757 = vpack.c.b16 %v742, %v741
      %v758 = vpack.c.b16 %v744, %v743
      %v759 = vpack.c.b16 %v746, %v745
      %v760 = vpack.c.b16 %v748, %v747
      %v761 = vpack.c.b16 %v750, %v749
      %v762 = vpack.c.b16 %v752, %v751
      %v763 = vpack.c.b16 %v754, %v753
      %v764 = vpack.c.b16 %v756, %v755
      %773 = vmatprep.subr.bf16.mxu0 0
      %774 = vmatpush1.bf16.msra.mxu0 %v757
      %775 = vmatprep.subr.bf16.mxu0 0
      %776 = vmatpush1.bf16.msra.mxu0 %v758
      %777 = vmatprep.subr.bf16.mxu0 0
      %778 = vmatpush1.bf16.msra.mxu0 %v759
      %779 = vmatprep.subr.bf16.mxu0 0
      %780 = vmatpush1.bf16.msra.mxu0 %v760
      %781 = vmatprep.subr.bf16.mxu0 0
      %782 = vmatpush1.bf16.msra.mxu0 %v761
      %783 = vmatprep.subr.bf16.mxu0 0
      %784 = vmatpush1.bf16.msra.mxu0 %v762
      %785 = vmatprep.subr.bf16.mxu0 0
      %786 = vmatpush1.bf16.msra.mxu0 %v763
      %787 = vmatprep.subr.bf16.mxu0 0
      %788 = vmatpush1.bf16.msra.mxu0 %v764
      %789 = vmatprep.subr.bf16.mxu0 0
      %790 = vmatpush1.bf16.msra.mxu0 0
      %791 = vmatprep.subr.bf16.mxu0 0
      %792 = vmatpush1.bf16.msra.mxu0 0
      %793 = vmatprep.subr.bf16.mxu0 0
      %794 = vmatpush1.bf16.msra.mxu0 0
      %795 = vmatprep.subr.bf16.mxu0 0
      %796 = vmatpush1.bf16.msra.mxu0 0
      %797 = vmatprep.subr.bf16.mxu0 0
      %798 = vmatpush1.bf16.msra.mxu0 0
      %799 = vmatprep.subr.bf16.mxu0 0
      %800 = vmatpush1.bf16.msra.mxu0 0
      %801 = vmatprep.subr.bf16.mxu0 0
      %802 = vmatpush1.bf16.msra.mxu0 0
      %803 = vmatprep.subr.bf16.mxu0 0
      %804 = vmatpush1.bf16.msra.mxu0 0
      %805 = vmatprep.mubr.bf16.mxu0 0
      %806 = vmatmul.mubr.bf16.gmra.mrb[0].mxu0 %v701
      %v807 = vpop.f32.mrb[0].mxu0
      %v808 = vadd.f32 %v723, %v807
      %v809 = vpop.f32.mrb[0].mxu0
      %v810 = vpop.f32.mrb[0].mxu0
      %v811 = vpop.f32.mrb[0].mxu0
      %812 = vdwg.mxu0
      %v813 = vtanh.pop %v808
      %v814 = vld [vmem:[%s349] sm:$0xff]
      %vm815 = vcmp.ge.u32.totalorder %v814, 858993459
      %v816 = vmul.f32 %v813, 1.25
      %v817 = vsel %vm815, %v816, 0.0
      %v818 = vld [vmem:[%s5] sm:$0xff]
      %v819 = vld [vmem:[%s5 + $0x8] sm:$0xff]
      %v820 = vld [vmem:[%s5 + $0x10] sm:$0xff]
      %v821 = vld [vmem:[%s5 + $0x18] sm:$0xff]
      %v822 = vld [vmem:[%s5 + $0x20] sm:$0xff]
      %v823 = vld [vmem:[%s5 + $0x28] sm:$0xff]
      %v824 = vld [vmem:[%s5 + $0x30] sm:$0xff]
      %v825 = vld [vmem:[%s5 + $0x38] sm:$0xff]
      %v826 = vld [vmem:[%s5 + $0x40] sm:$0xff]
      %v827 = vld [vmem:[%s5 + $0x48] sm:$0xff]
      %v828 = vld [vmem:[%s5 + $0x50] sm:$0xff]
      %v829 = vld [vmem:[%s5 + $0x58] sm:$0xff]
      %v830 = vld [vmem:[%s5 + $0x60] sm:$0xff]
      %v831 = vld [vmem:[%s5 + $0x68] sm:$0xff]
      %v832 = vld [vmem:[%s5 + $0x70] sm:$0xff]
      %v833 = vld [vmem:[%s5 + $0x78] sm:$0xff]
      %v834 = vld [vmem:[%s6] sm:$0x1]
      %v836 = vlaneseq
      %v837 = vshrl.u32 %v836, 7
      %v838 = vsub.s32 0, %v837
      %v839 = vrot.slane %v834, %v838
      %841 = vmatprep.subr.mxu0 0.0
      %842 = vmatpush1.msra.mxu0 %v818
      %843 = vmatprep.subr.mxu0 0.0
      %844 = vmatpush1.msra.mxu0 %v819
      %845 = vmatprep.subr.mxu0 0.0
      %846 = vmatpush1.msra.mxu0 %v820
      %847 = vmatprep.subr.mxu0 0.0
      %848 = vmatpush1.msra.mxu0 %v821
      %849 = vmatprep.subr.mxu0 0.0
      %850 = vmatpush1.msra.mxu0 %v822
      %851 = vmatprep.subr.mxu0 0.0
      %852 = vmatpush1.msra.mxu0 %v823
      %853 = vmatprep.subr.mxu0 0.0
      %854 = vmatpush1.msra.mxu0 %v824
      %855 = vmatprep.subr.mxu0 0.0
      %856 = vmatpush1.msra.mxu0 %v825
      %857 = vmatprep.subr.mxu0 0.0
      %858 = vmatpush1.msra.mxu0 %v826
      %859 = vmatprep.subr.mxu0 0.0
      %860 = vmatpush1.msra.mxu0 %v827
      %861 = vmatprep.subr.mxu0 0.0
      %862 = vmatpush1.msra.mxu0 %v828
      %863 = vmatprep.subr.mxu0 0.0
      %864 = vmatpush1.msra.mxu0 %v829
      %865 = vmatprep.subr.mxu0 0.0
      %866 = vmatpush1.msra.mxu0 %v830
      %867 = vmatprep.subr.mxu0 0.0
      %868 = vmatpush1.msra.mxu0 %v831
      %869 = vmatprep.subr.mxu0 0.0
      %870 = vmatpush1.msra.mxu0 %v832
      %871 = vmatprep.subr.mxu0 0.0
      %872 = vmatpush1.msra.mxu0 %v833
      %873 = vmatprep.subr.mxu0 0.0
      %874 = vmatpush1.msra.mxu0 0.0
      %875 = vmatprep.subr.mxu0 0.0
      %876 = vmatpush1.msra.mxu0 0.0
      %877 = vmatprep.subr.mxu0 0.0
      %878 = vmatpush1.msra.mxu0 0.0
      %879 = vmatprep.subr.mxu0 0.0
      %880 = vmatpush1.msra.mxu0 0.0
      %881 = vmatprep.subr.mxu0 0.0
      %882 = vmatpush1.msra.mxu0 0.0
      %883 = vmatprep.subr.mxu0 0.0
      %884 = vmatpush1.msra.mxu0 0.0
      %885 = vmatprep.subr.mxu0 0.0
      %886 = vmatpush1.msra.mxu0 0.0
      %887 = vmatprep.subr.mxu0 0.0
      %888 = vmatpush1.msra.mxu0 0.0
      %889 = vmatprep.subr.mxu0 0.0
      %890 = vmatpush1.msra.mxu0 0.0
      %891 = vmatprep.subr.mxu0 0.0
      %892 = vmatpush1.msra.mxu0 0.0
      %893 = vmatprep.subr.mxu0 0.0
      %894 = vmatpush1.msra.mxu0 0.0
      %895 = vmatprep.subr.mxu0 0.0
      %896 = vmatpush1.msra.mxu0 0.0
      %897 = vmatprep.subr.mxu0 0.0
      %898 = vmatpush1.msra.mxu0 0.0
      %899 = vmatprep.subr.mxu0 0.0
      %900 = vmatpush1.msra.mxu0 0.0
      %901 = vmatprep.subr.mxu0 0.0
      %902 = vmatpush1.msra.mxu0 0.0
      %903 = vmatprep.subr.mxu0 0.0
      %904 = vmatpush1.msra.mxu0 0.0
      %905 = vmatprep.mubr.f32.mxu0 0.0
      %906 = vmatmul.mubr.f32.gmra.mrb[0].mxu0 %v817
      %v907 = vpop.f32.mrb[0].mxu0
      %v908 = vadd.f32 %v839, %v907
      %v909 = vpop.f32.mrb[0].mxu0
      %910 = vdwg.mxu0
      %911 = vst [vmem:[%s353] sm:$0xff] %v908
      %p912 = scmp.lt.s32.totalorder %s19, 1
      %s913 = scalar_select %p912, %s19, 1
      %s914 = smul.addr %s913, 8
      %s915 = scalar_lea.vmem %s8, %s914
      // Predicated region
      $region53: #{net_forward.1} parent=51 // pred_check
        %p916 = pneg %p222
      $region54: #{net_forward.1} parent=51 // pred_check_branch
        %918 = sbr.rel (%p916) target = $region56
      $region55: #{net_forward.1} parent=51 // pred_region
        _
      $region56: #{net_forward.1} parent=51 // pred_fallthru
        _
    $region52: #{net_forward.1} parent=5 // pred_fallthru
      _
    %p919 = scmp.le.s32.totalorder 2, %s14
    // Predicated region
    $region57: #{net_forward.1} parent=5 // pred_check
      %p920 = pneg %p919
    $region58: #{net_forward.1} parent=5 // pred_check_branch
      %922 = sbr.rel (%p920) target = $region60
    $region59: #{net_forward.1} parent=5 // pred_region
      %s923 = ssub.s32 %s14, 2
      // Predicated region
      $region61: #{net_forward.1} parent=59 // pred_check
        %p924 = pneg %p228
      $region62: #{net_forward.1} parent=59 // pred_check_branch
        %926 = sbr.rel (%p924) target = $region64
      $region63: #{net_forward.1} parent=59 // pred_region
        %p927 = scmp.lt.s32.totalorder %s20, 1
        %s928 = scalar_select %p927, %s20, 1
        %s929 = smul.addr %s928, 8
        %s930 = scalar_lea.vmem %s8, %s929
      $region64: #{net_forward.1} parent=59 // pred_fallthru
        _
    $region60: #{net_forward.1} parent=5 // pred_fallthru
      _
  $region6: #{net_forward.1} parent=0 // loop_footer
    %s18 = sadd.s32 1, %s14
  $region7: #{net_forward.1} parent=0 // loop_footer_branch
    %13 = sbr.rel target = $region3
  $region8: #{net_forward.1} parent=0 // loop_exit
    _

</llo_original>
